<compile_context>
chip_gen: v7x
topology: tpu7x:2x2x1
jax: 0.10.0
libtpu: 0.0.40
codegen_flags: <defaults>
</compile_context>

<pallas_src>
import jax
import jax.numpy as jnp
from jax.experimental import pallas as pl
from jax.experimental.pallas import tpu as pltpu


_VMEM_BUDGET = 40 * 1024 * 1024      # conservative cross-generation block budget
_VMEM_LIMIT_CAP = 60 * 1024 * 1024   # never ask for more than fits v7x's 64 MiB


def _round_up(a: int, b: int) -> int:
    return ((a + b - 1) // b) * b


def _largest_divisor_tile(total: int, desired: int, align: int = 128) -> int:
    """Largest multiple of `align` <= desired that divides `total` (total % align == 0)."""
    t = min(desired, total)
    t = max(align, (t // align) * align)
    while total % t:
        t -= align
    return t


def _device_defaults():
    """Generation-aware tile defaults (safe fallbacks if detection fails)."""
    try:
        kind = jax.devices()[0].device_kind.lower()
    except Exception:  # pragma: no cover - defensive
        kind = ""
    if "v5 lite" in kind or "v5e" in kind or "v5litepod" in kind:
        # v5e crosses its roofline around tm~256-384; bigger tiles add nothing.
        return dict(tm=384, tn=256, tk=512, max_fused_k=8192)
    if "v7" in kind:
        # v7x: only 64 MiB VMEM per TC -> smaller fused-K ceiling.
        return dict(tm=512, tn=256, tk=512, max_fused_k=4096)
    # v6e and default.
    return dict(tm=512, tn=256, tk=512, max_fused_k=8192)


# ----------------------------------------------------------------------------
# Kernels
# ----------------------------------------------------------------------------

def _epilogue(proj_f32, bm_tile, out_dtype):
    """bias add + masked gating: (proj + b) * where(mask, silu(proj + b), 1)."""
    proj = proj_f32 + bm_tile[0:1, :]                          # bias row, bcast over M
    gate = jnp.where(bm_tile[1:2, :] > 0.5, jax.nn.silu(proj), 1.0)
    return (proj * gate).astype(out_dtype)


def _mglu_fused_kernel(x_ref, w_ref, bm_ref, o_ref):
    """K fits in VMEM: single matmul + fused epilogue per (tm, tn) tile."""
    proj = jnp.dot(x_ref[...], w_ref[...], preferred_element_type=jnp.float32)
    o_ref[...] = _epilogue(proj, bm_ref[...], o_ref.dtype)


def _mglu_reduce_kernel(x_ref, w_ref, bm_ref, o_ref, acc_ref):
    """Large K: K-innermost reduction with a resident f32 accumulator."""
    k = pl.program_id(2)
    partial = jnp.dot(x_ref[...], w_ref[...], preferred_element_type=jnp.float32)

    @pl.when(k == 0)
    def _():
        acc_ref[...] = partial            # no zero-fill + add on the first k step

    @pl.when(k > 0)
    def _():
        acc_ref[...] += partial

    @pl.when(k == pl.num_programs(2) - 1)
    def _():
        o_ref[...] = _epilogue(acc_ref[...], bm_ref[...], o_ref.dtype)


# ----------------------------------------------------------------------------
# One-time weight-side preparation (hoisted out of the per-call hot path)
# ----------------------------------------------------------------------------

def prepare_mglu_params(weight_t, bias, mask, *, compute_dtype=jnp.bfloat16,
                        tn=None, tk=None, max_fused_k=None):
    """Pad W to tile multiples, cast to the MXU dtype, pack bias + hard mask.

    Call this once at init time and reuse the result across forward calls so the
    HBM-side pad/cast copies of W are not paid on every call.
    Padding is exactly zero so sliced-off padded-N columns stay benign.
    """
    cfg = _device_defaults()
    tn = tn or cfg["tn"]
    tk = tk or cfg["tk"]
    max_fused_k = max_fused_k or cfg["max_fused_k"]

    K, N = weight_t.shape
    Np = _round_up(N, 128)
    tn = _largest_divisor_tile(Np, tn)

    fused = K <= max_fused_k
    if fused:
        Kp = _round_up(K, 128)
        tk = Kp
    else:
        tk = max(128, (tk // 128) * 128)
        Kp = _round_up(K, tk)

    w = weight_t
    if (Kp, Np) != (K, N):
        w = jnp.pad(w, ((0, Kp - K), (0, Np - N)))
    w = w.astype(compute_dtype)

    # bias (row 0) + precomputed hard mask (row 1, 1.0/0.0) packed into one operand.
    bias_row = jnp.pad(bias.astype(jnp.float32), (0, Np - N))
    mask_row = jnp.pad((mask >= 0).astype(jnp.float32), (0, Np - N))
    bm = jnp.stack([bias_row, mask_row], axis=0)               # (2, Np) f32

    return dict(w=w, bm=bm, K=K, N=N, Kp=Kp, Np=Np, tn=tn, tk=tk,
                fused=fused, compute_dtype=compute_dtype)


# ----------------------------------------------------------------------------
# Forward
# ----------------------------------------------------------------------------

def mglu_forward(x, params, *, tm=None, out_dtype=None):
    """x: (..., dim_in); params: result of prepare_mglu_params.

    Pass out_dtype=jnp.bfloat16 to halve output write traffic when downstream
    accepts it (default keeps x.dtype).
    """
    cfg = _device_defaults()
    tm = tm or cfg["tm"]
    out_dtype = out_dtype or x.dtype

    K, N = params["K"], params["N"]
    Kp, Np = params["Kp"], params["Np"]
    tn, tk = params["tn"], params["tk"]
    fused = params["fused"]
    w, bm = params["w"], params["bm"]
    compute_dtype = params["compute_dtype"]

    orig_shape = x.shape
    assert orig_shape[-1] == K, "last dim of x must equal dim_in"
    x2d = x.reshape(-1, K)
    M = x2d.shape[0]

    itemsize = jnp.dtype(compute_dtype).itemsize
    out_itemsize = jnp.dtype(out_dtype).itemsize

    # --- M tile: cap at rounded-up M, keep 128-aligned. -----------------------
    tm = min(tm, _round_up(max(M, 1), 128))
    tm = max(128, (tm // 128) * 128)
    Mp = _round_up(M, tm)

    # --- VMEM budget: shrink tm if the fused full-K blocks would not fit. -----
    if fused:
        def _fused_need(tm_):
            return (2 * (tm_ * Kp * itemsize + Kp * tn * itemsize
                         + tm_ * tn * out_itemsize) + 2 * (2 * tn * 4))
        while _fused_need(tm) > _VMEM_BUDGET and tm > 128:
            tm -= 128
        Mp = _round_up(M, tm)

    # --- Ensure >= 2 parallel tiles where possible (v7x megacore). ------------
    if (Mp // tm) * (Np // tn) < 2:
        if Np // 128 >= 2:
            tn = _largest_divisor_tile(Np, Np // 2)
        elif Mp // 128 >= 2:
            tm = max(128, ((tm // 2) // 128) * 128)
            Mp = _round_up(M, tm)

    # --- Explicit scoped-VMEM limit from the real block footprint. ------------
    if fused:
        vmem_need = (2 * (tm * Kp * itemsize + Kp * tn * itemsize
                          + tm * tn * out_itemsize) + 2 * (2 * tn * 4))
    else:
        vmem_need = (2 * (tm * tk * itemsize + tk * tn * itemsize
                          + tm * tn * out_itemsize)
                     + tm * tn * 4 + 2 * (2 * tn * 4))
    vmem_limit = int(min(max(vmem_need * 5 // 4 + (2 << 20), 24 << 20),
                         _VMEM_LIMIT_CAP))

    # --- Per-call x prep (pad to tile multiples, cast to MXU dtype). ----------
    x_c = x2d
    if Mp != M or Kp != K:
        x_c = jnp.pad(x_c, ((0, Mp - M), (0, Kp - K)))
    x_c = x_c.astype(compute_dtype)

    gi, gj = Mp // tm, Np // tn

    if fused:
        # Shape-aware residency: re-stream whichever operand is cheaper.
        w_restream_bytes = gi * Kp * Np    # j innermost: x block resident, W streamed
        x_restream_bytes = gj * Mp * Kp    # i innermost: W block resident, x streamed
        if w_restream_bytes <= x_restream_bytes:
            grid = (gi, gj)
            x_map = lambda i, j: (i, 0)
            w_map = lambda i, j: (0, j)
            bm_map = lambda i, j: (0, j)
            o_map = lambda i, j: (i, j)
        else:
            grid = (gj, gi)
            x_map = lambda j, i: (i, 0)
            w_map = lambda j, i: (0, j)
            bm_map = lambda j, i: (0, j)
            o_map = lambda j, i: (i, j)

        out = pl.pallas_call(
            _mglu_fused_kernel,
            out_shape=jax.ShapeDtypeStruct((Mp, Np), out_dtype),
            grid_spec=pltpu.PrefetchScalarGridSpec(
                num_scalar_prefetch=0,
                grid=grid,
                in_specs=[
                    pl.BlockSpec((tm, Kp), x_map),    # x row block (full K)
                    pl.BlockSpec((Kp, tn), w_map),    # W column block (full K)
                    pl.BlockSpec((2, tn), bm_map),    # bias + hard mask
                ],
                out_specs=pl.BlockSpec((tm, tn), o_map),
            ),
            compiler_params=pltpu.CompilerParams(
                dimension_semantics=("parallel", "parallel"),
                vmem_limit_bytes=vmem_limit),
        )(x_c, w, bm)
    else:
        out = pl.pallas_call(
            _mglu_reduce_kernel,
            out_shape=jax.ShapeDtypeStruct((Mp, Np), out_dtype),
            grid_spec=pltpu.PrefetchScalarGridSpec(
                num_scalar_prefetch=0,
                grid=(gi, gj, Kp // tk),
                in_specs=[
                    pl.BlockSpec((tm, tk), lambda i, j, k: (i, k)),
                    pl.BlockSpec((tk, tn), lambda i, j, k: (k, j)),
                    pl.BlockSpec((2, tn), lambda i, j, k: (0, j)),
                ],
                out_specs=pl.BlockSpec((tm, tn), lambda i, j, k: (i, j)),
                scratch_shapes=[pltpu.VMEM((tm, tn), jnp.float32)],
            ),
            compiler_params=pltpu.CompilerParams(
                dimension_semantics=("parallel", "parallel", "arbitrary"),
                vmem_limit_bytes=vmem_limit),
        )(x_c, w, bm)

    out = out[:M, :N]
    return out.reshape(orig_shape[:-1] + (N,))


def mglu(x, weight_t, bias, mask, **kwargs):
    """One-shot convenience wrapper (weight prep NOT hoisted; prefer prepare+forward)."""
    params = prepare_mglu_params(weight_t, bias, mask)
    return mglu_forward(x, params, **kwargs)


def mglu_reference(x, weight_t, bias, mask, compute_dtype=jnp.bfloat16):
    """Pure-JAX reference using the same bf16-operand / f32-accumulate matmul."""
    proj = jnp.dot(x.astype(compute_dtype), weight_t.astype(compute_dtype),
                   preferred_element_type=jnp.float32) + bias
    gated = proj * jax.nn.silu(proj)
    return jnp.where(mask >= 0.0, gated, proj).astype(x.dtype)


if __name__ == "__main__":
    key = jax.random.PRNGKey(0)

    def make_inputs(k, batch, seq, dim_in, dim_out):
        kx, kw, kb, km = jax.random.split(k, 4)
        x = jax.random.normal(kx, (batch, seq, dim_in), dtype=jnp.float32)
        bound = 1.0 / (dim_in ** 0.5)
        weight_t = jax.random.uniform(kw, (dim_in, dim_out), minval=-bound,
                                      maxval=bound, dtype=jnp.float32)
        bias = jax.random.uniform(kb, (dim_out,), minval=-bound, maxval=bound,
                                  dtype=jnp.float32)
        mask = jax.random.normal(km, (dim_out,), dtype=jnp.float32)
        return x, weight_t, bias, mask

    k1, k2 = jax.random.split(key)

    # Case 1: small K -> fused kernel; weight prep hoisted once, forward jitted.
    x, w_t, b, m = make_inputs(k1, batch=2, seq=8, dim_in=256, dim_out=256)
    params = prepare_mglu_params(w_t, b, m)
    fwd = jax.jit(lambda xx: mglu_forward(xx, params))
    out = jax.block_until_ready(fwd(x))
    ref = mglu_reference(x, w_t, b, m)
    assert out.shape == (2, 8, 256)
    assert jnp.allclose(out, ref, atol=2e-3, rtol=2e-3), "fused path mismatch"

    # Case 2: force the K-reduction path (max_fused_k < K), ragged N exercises padding.
    x, w_t, b, m = make_inputs(k2, batch=2, seq=8, dim_in=512, dim_out=320)
    params = prepare_mglu_params(w_t, b, m, max_fused_k=128, tk=256)
    out = jax.block_until_ready(mglu_forward(x, params))
    ref = mglu_reference(x, w_t, b, m)
    assert out.shape == (2, 8, 320)
    assert jnp.allclose(out, ref, atol=2e-3, rtol=2e-3), "reduce path mismatch"

    print("KERNEL_OK")
</pallas_src>

<mosaic_0001>
module attributes {stable_mosaic.version = 11 : i64} {
  func.func @_mglu_fused_kernel(%arg0: i32, %arg1: i32, %arg2: memref<128x256xbf16, #tpu.memory_space<vmem>>, %arg3: memref<256x128xbf16, #tpu.memory_space<vmem>>, %arg4: memref<2x128xf32, #tpu.memory_space<vmem>>, %arg5: memref<128x128xf32, #tpu.memory_space<vmem>>) attributes {dimension_semantics = [#tpu.dimension_semantics<parallel>, #tpu.dimension_semantics<parallel>], iteration_bounds = array<i64: 1, 2>, scalar_prefetch = 0 : i64, scratch_operands = 0 : i64, tpu.core_type = #tpu.core_type<tc>, window_params = [{transform_indices = @transform_0, window_bounds = array<i64: 128, 256>}, {transform_indices = @transform_1, window_bounds = array<i64: 256, 128>}, {transform_indices = @transform_2, window_bounds = array<i64: 2, 128>}, {transform_indices = @transform_3, window_bounds = array<i64: 128, 128>}]} {
    %c0 = arith.constant 0 : index
    %c0_0 = arith.constant 0 : index
    %0 = vector.load %arg2[%c0, %c0_0] : memref<128x256xbf16, #tpu.memory_space<vmem>>, vector<128x256xbf16>
    %c0_1 = arith.constant 0 : index
    %c0_2 = arith.constant 0 : index
    %1 = vector.load %arg3[%c0_1, %c0_2] : memref<256x128xbf16, #tpu.memory_space<vmem>>, vector<256x128xbf16>
    %cst = arith.constant dense<0.000000e+00> : vector<128x128xf32>
    %2 = tpu.matmul %0, %1, %cst {dimension_numbers = #tpu.dot_dimension_numbers<[1], [0], [0], [1], [0, 0, 1, 1], [], []>} : vector<128x256xbf16>, vector<256x128xbf16>, vector<128x128xf32> -> vector<128x128xf32>
    %c0_3 = arith.constant 0 : index
    %c0_4 = arith.constant 0 : index
    %3 = vector.load %arg4[%c0_3, %c0_4] : memref<2x128xf32, #tpu.memory_space<vmem>>, vector<2x128xf32>
    %4 = vector.extract_strided_slice %3 {offsets = [0, 0], sizes = [1, 128], strides = [1, 1]} : vector<2x128xf32> to vector<1x128xf32>
    %5 = vector.broadcast %4 : vector<1x128xf32> to vector<128x128xf32>
    %6 = arith.addf %2, %5 : vector<128x128xf32>
    %7 = vector.extract_strided_slice %3 {offsets = [1, 0], sizes = [1, 128], strides = [1, 1]} : vector<2x128xf32> to vector<1x128xf32>
    %cst_5 = arith.constant 5.000000e-01 : f32
    %8 = vector.broadcast %cst_5 : f32 to vector<1x128xf32>
    %9 = arith.cmpf ogt, %7, %8 : vector<1x128xf32>
    %10 = arith.negf %6 : vector<128x128xf32>
    %11 = math.exp %10 : vector<128x128xf32>
    %cst_6 = arith.constant 1.000000e+00 : f32
    %12 = vector.broadcast %cst_6 : f32 to vector<128x128xf32>
    %13 = arith.addf %12, %11 : vector<128x128xf32>
    %14 = arith.divf %12, %13 : vector<128x128xf32>
    %15 = arith.mulf %6, %14 : vector<128x128xf32>
    %cst_7 = arith.constant 1.000000e+00 : f32
    %16 = vector.shape_cast %9 : vector<1x128xi1> to vector<1x128xi1>
    %17 = vector.broadcast %16 : vector<1x128xi1> to vector<128x128xi1>
    %18 = vector.broadcast %cst_7 : f32 to vector<128x128xf32>
    %19 = arith.select %17, %15, %18 : vector<128x128xi1>, vector<128x128xf32>
    %20 = arith.mulf %6, %19 : vector<128x128xf32>
    %c0_8 = arith.constant 0 : index
    %c0_9 = arith.constant 0 : index
    %21 = vector.load %arg5[%c0_8, %c0_9] : memref<128x128xf32, #tpu.memory_space<vmem>>, vector<128x128xf32>
    tpu.vector_store %arg5[%c0_8, %c0_9], %20 {strides = array<i32>} : memref<128x128xf32, #tpu.memory_space<vmem>>, vector<128x128xf32>,
    return
  }
  func.func @transform_0(%arg0: i32, %arg1: i32) -> (i32, i32) {
    %c0_i32 = arith.constant 0 : i32
    %c0_i32_0 = arith.constant 0 : i32
    return %arg0, %c0_i32 : i32, i32
  }
  func.func @transform_1(%arg0: i32, %arg1: i32) -> (i32, i32) {
    %c0_i32 = arith.constant 0 : i32
    %c0_i32_0 = arith.constant 0 : i32
    return %c0_i32, %arg1 : i32, i32
  }
  func.func @transform_2(%arg0: i32, %arg1: i32) -> (i32, i32) {
    %c0_i32 = arith.constant 0 : i32
    %c0_i32_0 = arith.constant 0 : i32
    return %c0_i32, %arg1 : i32, i32
  }
  func.func @transform_3(%arg0: i32, %arg1: i32) -> (i32, i32) {
    %c0_i32 = arith.constant 0 : i32
    return %arg0, %arg1 : i32, i32
  }
}

</mosaic_0001>

<llo_original>
// kernel: _lambda_.1
$region0: #{_lambda_.1}
  #allocation0 [shape = 'u32[]', space=smem, size = 0x4, offset = 0x4, fixed_abs, tag = 'smem constant byte address 0x4 - core index']
  #allocation1 [shape = 'u32[144,128]{1,0:T(1,128)}', space=vmem, size = 0x12000, scoped, tag = 'internal scratch']
  %s0 = inlined_call_operand.vmem [shape: bf16[128,256], index: 0, kind: input, shape index: {}]
  %s1 = inlined_call_operand.vmem [shape: bf16[256,256], index: 1, kind: input, shape index: {}]
  %s2 = inlined_call_operand.vmem [shape: f32[2,256], index: 2, kind: input, shape index: {}]
  %s3 = inlined_call_operand.vmem [shape: f32[128,256], index: 3, kind: output, shape index: {}]
  %s4 = sld [smem:[#allocation0]]
  $region120: #{_lambda_.1} parent=0
    _
  %s6 = ssub.s32 1, %s4
  %s7 = scalar_select 0, %s6, %s4
  $region1: #{_lambda_.1} parent=0
    #allocation2 [shape = 'u8[131072]{0}', space=vmem, size = 0x20000, scoped, tag = 'input window, operand 1']
    #allocation3 [shape = 'u8[131072]{0}', space=vmem, size = 0x20000, scoped, tag = 'output window, operand 0']
    loop: start=0, step=1, limit=4
    $region2: #{_lambda_.1} parent=1 // loop_pre_header
      _
    $region3: #{_lambda_.1} parent=1 // loop_header
      %s9 = sphi 0, %s13
      %p10 = scmp.ge.s32.totalorder %s9, 4
      %s16 = sphi 0, %s28
      %s17 = sphi 0, %s24
      %s18 = sphi 0, %s16
      %s19 = sphi 0, %s17
      %s20 = sphi 0, %s18
      %s21 = sphi 0, %s19
      %s31 = sphi 0, %s33
      %s34 = sphi 0, %s31
      %s35 = sphi 0, %s34
      %s51 = sphi 0, %s35
      %s57 = sphi 0, %s59
      %s60 = sphi 0, %s57
      %s61 = sphi 0, %s60
      %s77 = sphi 0, %s61
      %s83 = sphi 0, %s85
      %s86 = sphi 0, %s83
      %s87 = sphi 0, %s86
      %s103 = sphi 0, %s87
      %s111 = sphi 0, %s113
      %s114 = sphi 0, %s111
      %s115 = sphi 0, %s114
      %s131 = sphi 0, %s115
    $region4: #{_lambda_.1} parent=1 // loop_header_branch
      %12 = sbr.rel (%p10) target = $region8
    $region5: #{_lambda_.1} parent=1 // loop_body
      %s14 = ssub.s32 %s9, 1
      %s15 = ssub.s32 %s9, 2
      %s22 = sadd.s32 1, %s17
      %p23 = scmp.ge.s32.totalorder %s22, 2
      %s24 = scalar_select %p23, 0, %s22
      %s25 = sadd.s32 1, %s16
      %s26 = scalar_select %p23, %s25, %s16
      %p27 = scmp.ge.s32.totalorder %s26, 1
      %s28 = scalar_select %p27, 0, %s26
      %s29 = ssub.s32 %s16, %s28
      %p30 = scmp.eq.s32.totalorder %s29, 0
      %s32 = sadd.s32 %s31, 1
      %s33 = scalar_select %p30, %s31, %s32
      %p36 = pneg %p30
      %p37 = scmp.eq.s32.totalorder %s9, 1
      %p38 = por %p36, %p37
      %p39 = scmp.ne.s32.totalorder %s31, %s34
      %p40 = scmp.eq.s32.totalorder %s9, 0
      %p41 = por %p39, %p40
      %p42 = scmp.ne.s32.totalorder %s31, %s34
      %p43 = scmp.eq.s32.totalorder %s14, 1
      %p44 = por %p42, %p43
      %p45 = scmp.ne.s32.totalorder %s34, %s35
      %p46 = scmp.eq.s32.totalorder %s14, 0
      %p47 = por %p45, %p46
      %p48 = scmp.ne.s32.totalorder %s34, %s35
      %p49 = scmp.eq.s32.totalorder %s15, 1
      %p50 = por %p48, %p49
      %p52 = scmp.ne.s32.totalorder %s35, %s51
      %p53 = scmp.eq.s32.totalorder %s15, 0
      %p54 = por %p52, %p53
      %s55 = ssub.s32 %s17, %s24
      %p56 = scmp.eq.s32.totalorder %s55, 0
      %s58 = sadd.s32 %s57, 1
      %s59 = scalar_select %p56, %s57, %s58
      %p62 = pneg %p56
      %p63 = scmp.eq.s32.totalorder %s9, 1
      %p64 = por %p62, %p63
      %p65 = scmp.ne.s32.totalorder %s57, %s60
      %p66 = scmp.eq.s32.totalorder %s9, 0
      %p67 = por %p65, %p66
      %p68 = scmp.ne.s32.totalorder %s57, %s60
      %p69 = scmp.eq.s32.totalorder %s14, 1
      %p70 = por %p68, %p69
      %p71 = scmp.ne.s32.totalorder %s60, %s61
      %p72 = scmp.eq.s32.totalorder %s14, 0
      %p73 = por %p71, %p72
      %p74 = scmp.ne.s32.totalorder %s60, %s61
      %p75 = scmp.eq.s32.totalorder %s15, 1
      %p76 = por %p74, %p75
      %p78 = scmp.ne.s32.totalorder %s61, %s77
      %p79 = scmp.eq.s32.totalorder %s15, 0
      %p80 = por %p78, %p79
      %s81 = ssub.s32 %s17, %s24
      %p82 = scmp.eq.s32.totalorder %s81, 0
      %s84 = sadd.s32 %s83, 1
      %s85 = scalar_select %p82, %s83, %s84
      %p88 = pneg %p82
      %p89 = scmp.eq.s32.totalorder %s9, 1
      %p90 = por %p88, %p89
      %p91 = scmp.ne.s32.totalorder %s83, %s86
      %p92 = scmp.eq.s32.totalorder %s9, 0
      %p93 = por %p91, %p92
      %p94 = scmp.ne.s32.totalorder %s83, %s86
      %p95 = scmp.eq.s32.totalorder %s14, 1
      %p96 = por %p94, %p95
      %p97 = scmp.ne.s32.totalorder %s86, %s87
      %p98 = scmp.eq.s32.totalorder %s14, 0
      %p99 = por %p97, %p98
      %p100 = scmp.ne.s32.totalorder %s86, %s87
      %p101 = scmp.eq.s32.totalorder %s15, 1
      %p102 = por %p100, %p101
      %p104 = scmp.ne.s32.totalorder %s87, %s103
      %p105 = scmp.eq.s32.totalorder %s15, 0
      %p106 = por %p104, %p105
      %s107 = ssub.s32 %s16, %s28
      %s108 = ssub.s32 %s17, %s24
      %s109 = sor.u32 %s107, %s108
      %p110 = scmp.eq.s32.totalorder %s109, 0
      %s112 = sadd.s32 %s111, 1
      %s113 = scalar_select %p110, %s111, %s112
      %p116 = pneg %p110
      %p117 = scmp.eq.s32.totalorder %s9, 1
      %p118 = por %p116, %p117
      %p119 = scmp.ne.s32.totalorder %s111, %s114
      %p120 = scmp.eq.s32.totalorder %s9, 0
      %p121 = por %p119, %p120
      %p122 = scmp.ne.s32.totalorder %s111, %s114
      %p123 = scmp.eq.s32.totalorder %s14, 1
      %p124 = por %p122, %p123
      %p125 = scmp.ne.s32.totalorder %s114, %s115
      %p126 = scmp.eq.s32.totalorder %s14, 0
      %p127 = por %p125, %p126
      %p128 = scmp.ne.s32.totalorder %s114, %s115
      %p129 = scmp.eq.s32.totalorder %s15, 1
      %p130 = por %p128, %p129
      %p132 = scmp.ne.s32.totalorder %s115, %s131
      %p133 = scmp.eq.s32.totalorder %s15, 0
      %p134 = por %p132, %p133
      %p135 = scmp.le.s32.totalorder 1, %s9
      %p136 = scmp.lt.s32.totalorder %s9, 3
      %p137 = pnand %p135, %p136
      %p138 = pneg %p137
      // Predicated region
      $region9: #{_lambda_.1} parent=5 // pred_check
        _
      $region10: #{_lambda_.1} parent=5 // pred_check_branch
        %140 = sbr.rel (%p137) target = $region12
      $region11: #{_lambda_.1} parent=5 // pred_region
        %s141 = ssub.s32 %s9, 1
        // Predicated region
        $region13: #{_lambda_.1} parent=11 // pred_check
          %p142 = pneg %p47
        $region14: #{_lambda_.1} parent=11 // pred_check_branch
          %144 = sbr.rel (%p142) target = $region16
        $region15: #{_lambda_.1} parent=11 // pred_region
          %s145 = smul.u32 16, %s18
          %p146 = scmp.lt.s32.totalorder %s145, 15
          %s147 = scalar_select %p146, %s145, 15
          %s148 = smul.addr %s147, 2
          %s149 = smul.addr %s148, 4
          %s150 = scalar_lea.vmem %s0, %s149
          %s151 = smul.u32 16, %s18
        $region16: #{_lambda_.1} parent=11 // pred_fallthru
          _
      $region12: #{_lambda_.1} parent=5 // pred_fallthru
        _
      %p152 = scmp.lt.s32.totalorder %s9, 2
      // Predicated region
      $region17: #{_lambda_.1} parent=5 // pred_check
        %p153 = pneg %p152
      $region18: #{_lambda_.1} parent=5 // pred_check_branch
        %155 = sbr.rel (%p153) target = $region20
      $region19: #{_lambda_.1} parent=5 // pred_region
        // Predicated region
        $region21: #{_lambda_.1} parent=19 // pred_check
          %p156 = pneg %p67
        $region22: #{_lambda_.1} parent=19 // pred_check_branch
          %158 = sbr.rel (%p156) target = $region24
        $region23: #{_lambda_.1} parent=19 // pred_region
          %s159 = sand.u32 %s57, 1
          %s160 = sand.u32 %s57, 1
          %s161 = smul.addr %s160, 128
          %s162 = scalar_lea.vmem [#allocation2], %s161
          %s163 = smul.addr %s17, 4
          %s164 = scalar_lea.vmem %s1, %s163
          // Predicated region
          $region25: #{_lambda_.1} parent=23 // pred_check
            _
          $region26: #{_lambda_.1} parent=23 // pred_check_branch
            %166 = sbr.rel (0) target = $region28
          $region27: #{_lambda_.1} parent=23 // pred_region
            // Predicated region
            $region29: #{_lambda_.1} parent=27 // pred_check
              _
            $region30: #{_lambda_.1} parent=27 // pred_check_branch
              %168 = sbr.rel target = $region32
            $region31: #{_lambda_.1} parent=27 // pred_region
              // Predicated region
              $region44: #{_lambda_.1} parent=31 // pred_check
                _
              $region45: #{_lambda_.1} parent=31 // pred_check_branch
                %245 = sbr.rel (0) target = $region47
              $region46: #{_lambda_.1} parent=31 // pred_region
                loop: start=0, step=1, limit=1
                $region48: #{_lambda_.1} parent=46 // loop_pre_header
                  _
                $region49: #{_lambda_.1} parent=46 // loop_header
                  %s247 = sphi 0, %s251
                  %p248 = scmp.ge.s32.totalorder %s247, 1
                  %s252 = sphi %s164, %s164
                  %s253 = sphi %s162, %s162
                $region50: #{_lambda_.1} parent=46 // loop_header_branch
                  %250 = sbr.rel (%p248) target = $region54
                $region51: #{_lambda_.1} parent=46 // loop_body
                  _
                $region52: #{_lambda_.1} parent=46 // loop_footer
                  %s251 = sadd.s32 1, %s247
                $region53: #{_lambda_.1} parent=46 // loop_footer_branch
                  %246 = sbr.rel target = $region49
                $region54: #{_lambda_.1} parent=46 // loop_exit
                  _
                loop: start=0, step=1, limit=1
                $region55: #{_lambda_.1} parent=46 // loop_pre_header
                  _
                $region56: #{_lambda_.1} parent=46 // loop_header
                  %s256 = sphi 0, %s260
                  %p257 = scmp.ge.s32.totalorder %s256, 1
                  %s261 = sphi %s164, %s164
                  %s262 = sphi %s162, %s162
                $region57: #{_lambda_.1} parent=46 // loop_header_branch
                  %259 = sbr.rel (%p257) target = $region61
                $region58: #{_lambda_.1} parent=46 // loop_body
                  %v263 = vld [vmem:[%s261] sm:$0xf]
                  %264 = vst [vmem:[%s262] sm:$0xf] %v263
                  %v265 = vld [vmem:[%s261 + $0x8] sm:$0xf]
                  %266 = vst [vmem:[%s262 + $0x4] sm:$0xf] %v265
                  %v267 = vld [vmem:[%s261 + $0x10] sm:$0xf]
                  %268 = vst [vmem:[%s262 + $0x8] sm:$0xf] %v267
                  %v269 = vld [vmem:[%s261 + $0x18] sm:$0xf]
                  %270 = vst [vmem:[%s262 + $0xc] sm:$0xf] %v269
                  %v271 = vld [vmem:[%s261 + $0x20] sm:$0xf]
                  %272 = vst [vmem:[%s262 + $0x10] sm:$0xf] %v271
                  %v273 = vld [vmem:[%s261 + $0x28] sm:$0xf]
                  %274 = vst [vmem:[%s262 + $0x14] sm:$0xf] %v273
                  %v275 = vld [vmem:[%s261 + $0x30] sm:$0xf]
                  %276 = vst [vmem:[%s262 + $0x18] sm:$0xf] %v275
                  %v277 = vld [vmem:[%s261 + $0x38] sm:$0xf]
                  %278 = vst [vmem:[%s262 + $0x1c] sm:$0xf] %v277
                  %v279 = vld [vmem:[%s261 + $0x40] sm:$0xf]
                  %280 = vst [vmem:[%s262 + $0x20] sm:$0xf] %v279
                  %v281 = vld [vmem:[%s261 + $0x48] sm:$0xf]
                  %282 = vst [vmem:[%s262 + $0x24] sm:$0xf] %v281
                  %v283 = vld [vmem:[%s261 + $0x50] sm:$0xf]
                  %284 = vst [vmem:[%s262 + $0x28] sm:$0xf] %v283
                  %v285 = vld [vmem:[%s261 + $0x58] sm:$0xf]
                  %286 = vst [vmem:[%s262 + $0x2c] sm:$0xf] %v285
                  %v287 = vld [vmem:[%s261 + $0x60] sm:$0xf]
                  %288 = vst [vmem:[%s262 + $0x30] sm:$0xf] %v287
                  %v289 = vld [vmem:[%s261 + $0x68] sm:$0xf]
                  %290 = vst [vmem:[%s262 + $0x34] sm:$0xf] %v289
                  %v291 = vld [vmem:[%s261 + $0x70] sm:$0xf]
                  %292 = vst [vmem:[%s262 + $0x38] sm:$0xf] %v291
                  %v293 = vld [vmem:[%s261 + $0x78] sm:$0xf]
                  %294 = vst [vmem:[%s262 + $0x3c] sm:$0xf] %v293
                  %v295 = vld [vmem:[%s261 + $0x80] sm:$0xf]
                  %296 = vst [vmem:[%s262 + $0x40] sm:$0xf] %v295
                  %v297 = vld [vmem:[%s261 + $0x88] sm:$0xf]
                  %298 = vst [vmem:[%s262 + $0x44] sm:$0xf] %v297
                  %v299 = vld [vmem:[%s261 + $0x90] sm:$0xf]
                  %300 = vst [vmem:[%s262 + $0x48] sm:$0xf] %v299
                  %v301 = vld [vmem:[%s261 + $0x98] sm:$0xf]
                  %302 = vst [vmem:[%s262 + $0x4c] sm:$0xf] %v301
                  %v303 = vld [vmem:[%s261 + $0xa0] sm:$0xf]
                  %304 = vst [vmem:[%s262 + $0x50] sm:$0xf] %v303
                  %v305 = vld [vmem:[%s261 + $0xa8] sm:$0xf]
                  %306 = vst [vmem:[%s262 + $0x54] sm:$0xf] %v305
                  %v307 = vld [vmem:[%s261 + $0xb0] sm:$0xf]
                  %308 = vst [vmem:[%s262 + $0x58] sm:$0xf] %v307
                  %v309 = vld [vmem:[%s261 + $0xb8] sm:$0xf]
                  %310 = vst [vmem:[%s262 + $0x5c] sm:$0xf] %v309
                  %v311 = vld [vmem:[%s261 + $0xc0] sm:$0xf]
                  %312 = vst [vmem:[%s262 + $0x60] sm:$0xf] %v311
                  %v313 = vld [vmem:[%s261 + $0xc8] sm:$0xf]
                  %314 = vst [vmem:[%s262 + $0x64] sm:$0xf] %v313
                  %v315 = vld [vmem:[%s261 + $0xd0] sm:$0xf]
                  %316 = vst [vmem:[%s262 + $0x68] sm:$0xf] %v315
                  %v317 = vld [vmem:[%s261 + $0xd8] sm:$0xf]
                  %318 = vst [vmem:[%s262 + $0x6c] sm:$0xf] %v317
                  %v319 = vld [vmem:[%s261 + $0xe0] sm:$0xf]
                  %320 = vst [vmem:[%s262 + $0x70] sm:$0xf] %v319
                  %v321 = vld [vmem:[%s261 + $0xe8] sm:$0xf]
                  %322 = vst [vmem:[%s262 + $0x74] sm:$0xf] %v321
                  %v323 = vld [vmem:[%s261 + $0xf0] sm:$0xf]
                  %324 = vst [vmem:[%s262 + $0x78] sm:$0xf] %v323
                  %v325 = vld [vmem:[%s261 + $0xf8] sm:$0xf]
                  %326 = vst [vmem:[%s262 + $0x7c] sm:$0xf] %v325
                $region59: #{_lambda_.1} parent=46 // loop_footer
                  %s260 = sadd.s32 1, %s256
                $region60: #{_lambda_.1} parent=46 // loop_footer_branch
                  %255 = sbr.rel target = $region56
                $region61: #{_lambda_.1} parent=46 // loop_exit
                  _
              $region47: #{_lambda_.1} parent=31 // pred_fallthru
                _
            $region32: #{_lambda_.1} parent=27 // pred_fallthru
              _
            // Predicated region
            $region33: #{_lambda_.1} parent=27 // pred_check
              _
            $region34: #{_lambda_.1} parent=27 // pred_check_branch
              %170 = sbr.rel (0) target = $region36
            $region35: #{_lambda_.1} parent=27 // pred_region
              loop: start=0, step=1, limit=1
              $region37: #{_lambda_.1} parent=35 // loop_pre_header
                _
              $region38: #{_lambda_.1} parent=35 // loop_header
                %s173 = sphi 0, %s177
                %p174 = scmp.ge.s32.totalorder %s173, 1
                %s178 = sphi %s164, %s164
                %s179 = sphi %s162, %s162
              $region39: #{_lambda_.1} parent=35 // loop_header_branch
                %176 = sbr.rel (%p174) target = $region43
              $region40: #{_lambda_.1} parent=35 // loop_body
                %v180 = vld [vmem:[%s178] sm:$0xf]
                %181 = vst [vmem:[%s179] sm:$0xf] %v180
                %v182 = vld [vmem:[%s178 + $0x8] sm:$0xf]
                %183 = vst [vmem:[%s179 + $0x4] sm:$0xf] %v182
                %v184 = vld [vmem:[%s178 + $0x10] sm:$0xf]
                %185 = vst [vmem:[%s179 + $0x8] sm:$0xf] %v184
                %v186 = vld [vmem:[%s178 + $0x18] sm:$0xf]
                %187 = vst [vmem:[%s179 + $0xc] sm:$0xf] %v186
                %v188 = vld [vmem:[%s178 + $0x20] sm:$0xf]
                %189 = vst [vmem:[%s179 + $0x10] sm:$0xf] %v188
                %v190 = vld [vmem:[%s178 + $0x28] sm:$0xf]
                %191 = vst [vmem:[%s179 + $0x14] sm:$0xf] %v190
                %v192 = vld [vmem:[%s178 + $0x30] sm:$0xf]
                %193 = vst [vmem:[%s179 + $0x18] sm:$0xf] %v192
                %v194 = vld [vmem:[%s178 + $0x38] sm:$0xf]
                %195 = vst [vmem:[%s179 + $0x1c] sm:$0xf] %v194
                %v196 = vld [vmem:[%s178 + $0x40] sm:$0xf]
                %197 = vst [vmem:[%s179 + $0x20] sm:$0xf] %v196
                %v198 = vld [vmem:[%s178 + $0x48] sm:$0xf]
                %199 = vst [vmem:[%s179 + $0x24] sm:$0xf] %v198
                %v200 = vld [vmem:[%s178 + $0x50] sm:$0xf]
                %201 = vst [vmem:[%s179 + $0x28] sm:$0xf] %v200
                %v202 = vld [vmem:[%s178 + $0x58] sm:$0xf]
                %203 = vst [vmem:[%s179 + $0x2c] sm:$0xf] %v202
                %v204 = vld [vmem:[%s178 + $0x60] sm:$0xf]
                %205 = vst [vmem:[%s179 + $0x30] sm:$0xf] %v204
                %v206 = vld [vmem:[%s178 + $0x68] sm:$0xf]
                %207 = vst [vmem:[%s179 + $0x34] sm:$0xf] %v206
                %v208 = vld [vmem:[%s178 + $0x70] sm:$0xf]
                %209 = vst [vmem:[%s179 + $0x38] sm:$0xf] %v208
                %v210 = vld [vmem:[%s178 + $0x78] sm:$0xf]
                %211 = vst [vmem:[%s179 + $0x3c] sm:$0xf] %v210
                %v212 = vld [vmem:[%s178 + $0x80] sm:$0xf]
                %213 = vst [vmem:[%s179 + $0x40] sm:$0xf] %v212
                %v214 = vld [vmem:[%s178 + $0x88] sm:$0xf]
                %215 = vst [vmem:[%s179 + $0x44] sm:$0xf] %v214
                %v216 = vld [vmem:[%s178 + $0x90] sm:$0xf]
                %217 = vst [vmem:[%s179 + $0x48] sm:$0xf] %v216
                %v218 = vld [vmem:[%s178 + $0x98] sm:$0xf]
                %219 = vst [vmem:[%s179 + $0x4c] sm:$0xf] %v218
                %v220 = vld [vmem:[%s178 + $0xa0] sm:$0xf]
                %221 = vst [vmem:[%s179 + $0x50] sm:$0xf] %v220
                %v222 = vld [vmem:[%s178 + $0xa8] sm:$0xf]
                %223 = vst [vmem:[%s179 + $0x54] sm:$0xf] %v222
                %v224 = vld [vmem:[%s178 + $0xb0] sm:$0xf]
                %225 = vst [vmem:[%s179 + $0x58] sm:$0xf] %v224
                %v226 = vld [vmem:[%s178 + $0xb8] sm:$0xf]
                %227 = vst [vmem:[%s179 + $0x5c] sm:$0xf] %v226
                %v228 = vld [vmem:[%s178 + $0xc0] sm:$0xf]
                %229 = vst [vmem:[%s179 + $0x60] sm:$0xf] %v228
                %v230 = vld [vmem:[%s178 + $0xc8] sm:$0xf]
                %231 = vst [vmem:[%s179 + $0x64] sm:$0xf] %v230
                %v232 = vld [vmem:[%s178 + $0xd0] sm:$0xf]
                %233 = vst [vmem:[%s179 + $0x68] sm:$0xf] %v232
                %v234 = vld [vmem:[%s178 + $0xd8] sm:$0xf]
                %235 = vst [vmem:[%s179 + $0x6c] sm:$0xf] %v234
                %v236 = vld [vmem:[%s178 + $0xe0] sm:$0xf]
                %237 = vst [vmem:[%s179 + $0x70] sm:$0xf] %v236
                %v238 = vld [vmem:[%s178 + $0xe8] sm:$0xf]
                %239 = vst [vmem:[%s179 + $0x74] sm:$0xf] %v238
                %v240 = vld [vmem:[%s178 + $0xf0] sm:$0xf]
                %241 = vst [vmem:[%s179 + $0x78] sm:$0xf] %v240
                %v242 = vld [vmem:[%s178 + $0xf8] sm:$0xf]
                %243 = vst [vmem:[%s179 + $0x7c] sm:$0xf] %v242
              $region41: #{_lambda_.1} parent=35 // loop_footer
                %s177 = sadd.s32 1, %s173
              $region42: #{_lambda_.1} parent=35 // loop_footer_branch
                %172 = sbr.rel target = $region38
              $region43: #{_lambda_.1} parent=35 // loop_exit
                _
            $region36: #{_lambda_.1} parent=27 // pred_fallthru
              _
          $region28: #{_lambda_.1} parent=23 // pred_fallthru
            _
          %327 = vnop
        $region24: #{_lambda_.1} parent=19 // pred_fallthru
          _
        // Predicated region
        $region62: #{_lambda_.1} parent=19 // pred_check
          %p328 = pneg %p93
        $region63: #{_lambda_.1} parent=19 // pred_check_branch
          %330 = sbr.rel (%p328) target = $region65
        $region64: #{_lambda_.1} parent=19 // pred_region
          %p331 = scmp.lt.s32.totalorder %s17, 1
          %s332 = scalar_select %p331, %s17, 1
          %s333 = smul.addr %s332, 2
          %s334 = scalar_lea.vmem %s2, %s333
        $region65: #{_lambda_.1} parent=19 // pred_fallthru
          _
      $region20: #{_lambda_.1} parent=5 // pred_fallthru
        _
      %p335 = scmp.le.s32.totalorder 1, %s9
      %p336 = scmp.lt.s32.totalorder %s9, 3
      %p337 = pnand %p335, %p336
      %p338 = pneg %p337
      // Predicated region
      $region66: #{_lambda_.1} parent=5 // pred_check
        _
      $region67: #{_lambda_.1} parent=5 // pred_check_branch
        %340 = sbr.rel (%p337) target = $region69
      $region68: #{_lambda_.1} parent=5 // pred_region
        %s341 = ssub.s32 %s9, 1
        %s342 = sand.u32 %s60, 1
        %s343 = sand.u32 %s60, 1
        %s344 = smul.addr %s343, 128
        %s345 = scalar_lea.vmem [#allocation2], %s344
        // Predicated region
        $region70: #{_lambda_.1} parent=68 // pred_check
          %p346 = pneg %p73
        $region71: #{_lambda_.1} parent=68 // pred_check_branch
          %348 = sbr.rel (%p346) target = $region73
        $region72: #{_lambda_.1} parent=68 // pred_region
          _
        $region73: #{_lambda_.1} parent=68 // pred_fallthru
          _
        %s349 = smul.u32 16, %s18
        %p350 = scmp.lt.s32.totalorder %s349, 15
        %s351 = scalar_select %p350, %s349, 15
        %s352 = smul.addr %s351, 2
        %s353 = smul.addr %s352, 4
        %s354 = scalar_lea.vmem %s0, %s353
        %p355 = pneg %p47
        %p356 = pneg %p44
        %s357 = sand.u32 %s60, 1
        %s358 = sand.u32 %s60, 1
        %s359 = smul.addr %s358, 128
        %s360 = scalar_lea.vmem [#allocation2], %s359
        %p361 = pneg %p73
        %p362 = pneg %p70
        %p363 = scmp.lt.s32.totalorder %s19, 1
        %s364 = scalar_select %p363, %s19, 1
        %s365 = smul.addr %s364, 2
        %s366 = scalar_lea.vmem %s2, %s365
        %p367 = pneg %p99
        %p368 = pneg %p96
        %p369 = pneg %p127
        %p370 = pneg %p124
        %s371 = sand.u32 %s114, 1
        %s372 = sand.u32 %s114, 1
        %s373 = smul.addr %s372, 128
        %s374 = scalar_lea.vmem [#allocation3], %s373
        %s375 = smul.u32 16, %s18
        %p376 = scmp.lt.s32.totalorder %s375, 15
        %s377 = scalar_select %p376, %s375, 15
        %s378 = smul.addr %s377, 2
        %s379 = smul.addr %s378, 4
        %s380 = scalar_lea.vmem %s0, %s379
        %s381 = smul.u32 16, %s18
        %p382 = scmp.lt.s32.totalorder %s19, 1
        %s383 = scalar_select %p382, %s19, 1
        %s384 = smul.addr %s383, 2
        %s385 = scalar_lea.vmem %s2, %s384
        %s386 = smul.u32 16, %s18
        %v388 = vld [vmem:[%s380] sm:$0xff]
        %v389 = vld [vmem:[%s380 + $0x8] sm:$0xff]
        %v390 = vld [vmem:[%s380 + $0x10] sm:$0xff]
        %v391 = vld [vmem:[%s380 + $0x18] sm:$0xff]
        %v392 = vld [vmem:[%s380 + $0x20] sm:$0xff]
        %v393 = vld [vmem:[%s380 + $0x28] sm:$0xff]
        %v394 = vld [vmem:[%s380 + $0x30] sm:$0xff]
        %v395 = vld [vmem:[%s380 + $0x38] sm:$0xff]
        %v396 = vld [vmem:[%s380 + $0x40] sm:$0xff]
        %v397 = vld [vmem:[%s380 + $0x48] sm:$0xff]
        %v398 = vld [vmem:[%s380 + $0x50] sm:$0xff]
        %v399 = vld [vmem:[%s380 + $0x58] sm:$0xff]
        %v400 = vld [vmem:[%s380 + $0x60] sm:$0xff]
        %v401 = vld [vmem:[%s380 + $0x68] sm:$0xff]
        %v402 = vld [vmem:[%s380 + $0x70] sm:$0xff]
        %v403 = vld [vmem:[%s380 + $0x78] sm:$0xff]
        %v404 = vld [vmem:[%s345] sm:$0xf]
        %v405 = vld [vmem:[%s345 + $0x4] sm:$0xf]
        %v406 = vld [vmem:[%s345 + $0x8] sm:$0xf]
        %v407 = vld [vmem:[%s345 + $0xc] sm:$0xf]
        %v408 = vld [vmem:[%s345 + $0x10] sm:$0xf]
        %v409 = vld [vmem:[%s345 + $0x14] sm:$0xf]
        %v410 = vld [vmem:[%s345 + $0x18] sm:$0xf]
        %v411 = vld [vmem:[%s345 + $0x1c] sm:$0xf]
        %v412 = vld [vmem:[%s345 + $0x20] sm:$0xf]
        %v413 = vld [vmem:[%s345 + $0x24] sm:$0xf]
        %v414 = vld [vmem:[%s345 + $0x28] sm:$0xf]
        %v415 = vld [vmem:[%s345 + $0x2c] sm:$0xf]
        %v416 = vld [vmem:[%s345 + $0x30] sm:$0xf]
        %v417 = vld [vmem:[%s345 + $0x34] sm:$0xf]
        %v418 = vld [vmem:[%s345 + $0x38] sm:$0xf]
        %v419 = vld [vmem:[%s345 + $0x3c] sm:$0xf]
        %v420 = vld [vmem:[%s345 + $0x40] sm:$0xf]
        %v421 = vld [vmem:[%s345 + $0x44] sm:$0xf]
        %v422 = vld [vmem:[%s345 + $0x48] sm:$0xf]
        %v423 = vld [vmem:[%s345 + $0x4c] sm:$0xf]
        %v424 = vld [vmem:[%s345 + $0x50] sm:$0xf]
        %v425 = vld [vmem:[%s345 + $0x54] sm:$0xf]
        %v426 = vld [vmem:[%s345 + $0x58] sm:$0xf]
        %v427 = vld [vmem:[%s345 + $0x5c] sm:$0xf]
        %v428 = vld [vmem:[%s345 + $0x60] sm:$0xf]
        %v429 = vld [vmem:[%s345 + $0x64] sm:$0xf]
        %v430 = vld [vmem:[%s345 + $0x68] sm:$0xf]
        %v431 = vld [vmem:[%s345 + $0x6c] sm:$0xf]
        %v432 = vld [vmem:[%s345 + $0x70] sm:$0xf]
        %v433 = vld [vmem:[%s345 + $0x74] sm:$0xf]
        %v434 = vld [vmem:[%s345 + $0x78] sm:$0xf]
        %v435 = vld [vmem:[%s345 + $0x7c] sm:$0xf]
        %v436 = vld [vmem:[%s385] sm:$0x3]
        %v437 = vlaneseq
        %v438 = vshrl.u32 %v437, 7
        %v439 = vsub.s32 0, %v438
        %v440 = vrot.slane %v436, %v439
        %v457 = vunpack.c.l.b16 %v388
        %v458 = vunpack.c.h.b16 %v388
        %v459 = vunpack.c.l.b16 %v389
        %v460 = vunpack.c.h.b16 %v389
        %v461 = vunpack.c.l.b16 %v390
        %v462 = vunpack.c.h.b16 %v390
        %v463 = vunpack.c.l.b16 %v391
        %v464 = vunpack.c.h.b16 %v391
        %v465 = vunpack.c.l.b16 %v392
        %v466 = vunpack.c.h.b16 %v392
        %v467 = vunpack.c.l.b16 %v393
        %v468 = vunpack.c.h.b16 %v393
        %v469 = vunpack.c.l.b16 %v394
        %v470 = vunpack.c.h.b16 %v394
        %v471 = vunpack.c.l.b16 %v395
        %v472 = vunpack.c.h.b16 %v395
        %v473 = vunpack.c.l.b16 %v396
        %v474 = vunpack.c.h.b16 %v396
        %v475 = vunpack.c.l.b16 %v397
        %v476 = vunpack.c.h.b16 %v397
        %v477 = vunpack.c.l.b16 %v398
        %v478 = vunpack.c.h.b16 %v398
        %v479 = vunpack.c.l.b16 %v399
        %v480 = vunpack.c.h.b16 %v399
        %v481 = vunpack.c.l.b16 %v400
        %v482 = vunpack.c.h.b16 %v400
        %v483 = vunpack.c.l.b16 %v401
        %v484 = vunpack.c.h.b16 %v401
        %v485 = vunpack.c.l.b16 %v402
        %v486 = vunpack.c.h.b16 %v402
        %v487 = vunpack.c.l.b16 %v403
        %v488 = vunpack.c.h.b16 %v403
        %v489 = vpack.c.b16 %v459, %v457
        %v490 = vpack.c.b16 %v460, %v458
        %v491 = vpack.c.b16 %v463, %v461
        %v492 = vpack.c.b16 %v464, %v462
        %v493 = vpack.c.b16 %v467, %v465
        %v494 = vpack.c.b16 %v468, %v466
        %v495 = vpack.c.b16 %v471, %v469
        %v496 = vpack.c.b16 %v472, %v470
        %v497 = vpack.c.b16 %v475, %v473
        %v498 = vpack.c.b16 %v476, %v474
        %v499 = vpack.c.b16 %v479, %v477
        %v500 = vpack.c.b16 %v480, %v478
        %v501 = vpack.c.b16 %v483, %v481
        %v502 = vpack.c.b16 %v484, %v482
        %v503 = vpack.c.b16 %v487, %v485
        %v504 = vpack.c.b16 %v488, %v486
        %v553 = vunpack.c.l.b16 %v404
        %v554 = vunpack.c.l.b16 %v405
        %v555 = vunpack.c.l.b16 %v406
        %v556 = vunpack.c.l.b16 %v407
        %v557 = vunpack.c.l.b16 %v408
        %v558 = vunpack.c.l.b16 %v409
        %v559 = vunpack.c.l.b16 %v410
        %v560 = vunpack.c.l.b16 %v411
        %v561 = vunpack.c.l.b16 %v412
        %v562 = vunpack.c.l.b16 %v413
        %v563 = vunpack.c.l.b16 %v414
        %v564 = vunpack.c.l.b16 %v415
        %v565 = vunpack.c.l.b16 %v416
        %v566 = vunpack.c.l.b16 %v417
        %v567 = vunpack.c.l.b16 %v418
        %v568 = vunpack.c.l.b16 %v419
        %v569 = vunpack.c.l.b16 %v420
        %v570 = vunpack.c.l.b16 %v421
        %v571 = vunpack.c.l.b16 %v422
        %v572 = vunpack.c.l.b16 %v423
        %v573 = vunpack.c.l.b16 %v424
        %v574 = vunpack.c.l.b16 %v425
        %v575 = vunpack.c.l.b16 %v426
        %v576 = vunpack.c.l.b16 %v427
        %v577 = vunpack.c.l.b16 %v428
        %v578 = vunpack.c.l.b16 %v429
        %v579 = vunpack.c.l.b16 %v430
        %v580 = vunpack.c.l.b16 %v431
        %v581 = vunpack.c.l.b16 %v432
        %v582 = vunpack.c.l.b16 %v433
        %v583 = vunpack.c.l.b16 %v434
        %v584 = vunpack.c.l.b16 %v435
        %v585 = vpack.c.b16 %v554, %v553
        %v586 = vpack.c.b16 %v556, %v555
        %v587 = vpack.c.b16 %v558, %v557
        %v588 = vpack.c.b16 %v560, %v559
        %v589 = vpack.c.b16 %v562, %v561
        %v590 = vpack.c.b16 %v564, %v563
        %v591 = vpack.c.b16 %v566, %v565
        %v592 = vpack.c.b16 %v568, %v567
        %v593 = vpack.c.b16 %v570, %v569
        %v594 = vpack.c.b16 %v572, %v571
        %v595 = vpack.c.b16 %v574, %v573
        %v596 = vpack.c.b16 %v576, %v575
        %v597 = vpack.c.b16 %v578, %v577
        %v598 = vpack.c.b16 %v580, %v579
        %v599 = vpack.c.b16 %v582, %v581
        %v600 = vpack.c.b16 %v584, %v583
        %617 = vmatprep.subr.bf16.mxu0 0
        %618 = vmatpush1.bf16.msra.mxu0 %v585
        %619 = vmatprep.subr.bf16.mxu0 0
        %620 = vmatpush1.bf16.msra.mxu0 %v586
        %621 = vmatprep.subr.bf16.mxu0 0
        %622 = vmatpush1.bf16.msra.mxu0 %v587
        %623 = vmatprep.subr.bf16.mxu0 0
        %624 = vmatpush1.bf16.msra.mxu0 %v588
        %625 = vmatprep.subr.bf16.mxu0 0
        %626 = vmatpush1.bf16.msra.mxu0 %v589
        %627 = vmatprep.subr.bf16.mxu0 0
        %628 = vmatpush1.bf16.msra.mxu0 %v590
        %629 = vmatprep.subr.bf16.mxu0 0
        %630 = vmatpush1.bf16.msra.mxu0 %v591
        %631 = vmatprep.subr.bf16.mxu0 0
        %632 = vmatpush1.bf16.msra.mxu0 %v592
        %633 = vmatprep.subr.bf16.mxu0 0
        %634 = vmatpush1.bf16.msra.mxu0 %v593
        %635 = vmatprep.subr.bf16.mxu0 0
        %636 = vmatpush1.bf16.msra.mxu0 %v594
        %637 = vmatprep.subr.bf16.mxu0 0
        %638 = vmatpush1.bf16.msra.mxu0 %v595
        %639 = vmatprep.subr.bf16.mxu0 0
        %640 = vmatpush1.bf16.msra.mxu0 %v596
        %641 = vmatprep.subr.bf16.mxu0 0
        %642 = vmatpush1.bf16.msra.mxu0 %v597
        %643 = vmatprep.subr.bf16.mxu0 0
        %644 = vmatpush1.bf16.msra.mxu0 %v598
        %645 = vmatprep.subr.bf16.mxu0 0
        %646 = vmatpush1.bf16.msra.mxu0 %v599
        %647 = vmatprep.subr.bf16.mxu0 0
        %648 = vmatpush1.bf16.msra.mxu0 %v600
        %649 = vmatprep.mubr.bf16.mxu0 %v490
        %650 = vmatmul.mubr.bf16.gmra.mrb[0].mxu0 %v489
        %v651 = vpop.f32.mrb[0].mxu0
        %v652 = vadd.f32 %v440, %v651
        %v653 = vpop.f32.mrb[0].mxu0
        %v654 = vpop.f32.mrb[0].mxu0
        %v655 = vadd.f32 %v440, %v654
        %v656 = vpop.f32.mrb[0].mxu0
        %657 = vmatprep.mubr.bf16.mxu0 %v492
        %658 = vmatmul.mubr.bf16.gmra.mrb[0].mxu0 %v491
        %v659 = vpop.f32.mrb[0].mxu0
        %v660 = vadd.f32 %v440, %v659
        %v661 = vpop.f32.mrb[0].mxu0
        %v662 = vpop.f32.mrb[0].mxu0
        %v663 = vadd.f32 %v440, %v662
        %v664 = vpop.f32.mrb[0].mxu0
        %665 = vmatprep.mubr.bf16.mxu0 %v494
        %666 = vmatmul.mubr.bf16.gmra.mrb[0].mxu0 %v493
        %v667 = vpop.f32.mrb[0].mxu0
        %v668 = vadd.f32 %v440, %v667
        %v669 = vpop.f32.mrb[0].mxu0
        %v670 = vpop.f32.mrb[0].mxu0
        %v671 = vadd.f32 %v440, %v670
        %v672 = vpop.f32.mrb[0].mxu0
        %673 = vmatprep.mubr.bf16.mxu0 %v496
        %674 = vmatmul.mubr.bf16.gmra.mrb[0].mxu0 %v495
        %v675 = vpop.f32.mrb[0].mxu0
        %v676 = vadd.f32 %v440, %v675
        %v677 = vpop.f32.mrb[0].mxu0
        %v678 = vpop.f32.mrb[0].mxu0
        %v679 = vadd.f32 %v440, %v678
        %v680 = vpop.f32.mrb[0].mxu0
        %681 = vmatprep.mubr.bf16.mxu0 %v498
        %682 = vmatmul.mubr.bf16.gmra.mrb[0].mxu0 %v497
        %v683 = vpop.f32.mrb[0].mxu0
        %v684 = vadd.f32 %v440, %v683
        %v685 = vpop.f32.mrb[0].mxu0
        %v686 = vpop.f32.mrb[0].mxu0
        %v687 = vadd.f32 %v440, %v686
        %v688 = vpop.f32.mrb[0].mxu0
        %689 = vmatprep.mubr.bf16.mxu0 %v500
        %690 = vmatmul.mubr.bf16.gmra.mrb[0].mxu0 %v499
        %v691 = vpop.f32.mrb[0].mxu0
        %v692 = vadd.f32 %v440, %v691
        %v693 = vpop.f32.mrb[0].mxu0
        %v694 = vpop.f32.mrb[0].mxu0
        %v695 = vadd.f32 %v440, %v694
        %v696 = vpop.f32.mrb[0].mxu0
        %697 = vmatprep.mubr.bf16.mxu0 %v502
        %698 = vmatmul.mubr.bf16.gmra.mrb[0].mxu0 %v501
        %v699 = vpop.f32.mrb[0].mxu0
        %v700 = vadd.f32 %v440, %v699
        %v701 = vpop.f32.mrb[0].mxu0
        %v702 = vpop.f32.mrb[0].mxu0
        %v703 = vadd.f32 %v440, %v702
        %v704 = vpop.f32.mrb[0].mxu0
        %705 = vmatprep.mubr.bf16.mxu0 %v504
        %706 = vmatmul.mubr.bf16.gmra.mrb[0].mxu0 %v503
        %v707 = vpop.f32.mrb[0].mxu0
        %v708 = vadd.f32 %v440, %v707
        %v709 = vpop.f32.mrb[0].mxu0
        %v710 = vpop.f32.mrb[0].mxu0
        %v711 = vadd.f32 %v440, %v710
        %v712 = vpop.f32.mrb[0].mxu0
        %713 = vdwg.mxu0
        %vm714 = vcmp.gt.f32.partialorder %v436, 0.5
        %v715 = vxor.u32 %v652, 2147483648
        %v716 = vxor.u32 %v655, 2147483648
        %v717 = vxor.u32 %v660, 2147483648
        %v718 = vxor.u32 %v663, 2147483648
        %v719 = vxor.u32 %v668, 2147483648
        %v720 = vxor.u32 %v671, 2147483648
        %v721 = vxor.u32 %v676, 2147483648
        %v722 = vxor.u32 %v679, 2147483648
        %v723 = vxor.u32 %v684, 2147483648
        %v724 = vxor.u32 %v687, 2147483648
        %v725 = vxor.u32 %v692, 2147483648
        %v726 = vxor.u32 %v695, 2147483648
        %v727 = vxor.u32 %v700, 2147483648
        %v728 = vxor.u32 %v703, 2147483648
        %v729 = vxor.u32 %v708, 2147483648
        %v730 = vxor.u32 %v711, 2147483648
        %v731 = vmul.f32 %v715, 1.442695
        %v732 = vpow.pop %v731
        %v733 = vmul.f32 %v716, 1.442695
        %v734 = vpow.pop %v733
        %v735 = vmul.f32 %v717, 1.442695
        %v736 = vpow.pop %v735
        %v737 = vmul.f32 %v718, 1.442695
        %v738 = vpow.pop %v737
        %v739 = vmul.f32 %v719, 1.442695
        %v740 = vpow.pop %v739
        %v741 = vmul.f32 %v720, 1.442695
        %v742 = vpow.pop %v741
        %v743 = vmul.f32 %v721, 1.442695
        %v744 = vpow.pop %v743
        %v745 = vmul.f32 %v722, 1.442695
        %v746 = vpow.pop %v745
        %v747 = vmul.f32 %v723, 1.442695
        %v748 = vpow.pop %v747
        %v749 = vmul.f32 %v724, 1.442695
        %v750 = vpow.pop %v749
        %v751 = vmul.f32 %v725, 1.442695
        %v752 = vpow.pop %v751
        %v753 = vmul.f32 %v726, 1.442695
        %v754 = vpow.pop %v753
        %v755 = vmul.f32 %v727, 1.442695
        %v756 = vpow.pop %v755
        %v757 = vmul.f32 %v728, 1.442695
        %v758 = vpow.pop %v757
        %v759 = vmul.f32 %v729, 1.442695
        %v760 = vpow.pop %v759
        %v761 = vmul.f32 %v730, 1.442695
        %v762 = vpow.pop %v761
        %v763 = vadd.f32 %v732, 1.0
        %v764 = vadd.f32 %v734, 1.0
        %v765 = vadd.f32 %v736, 1.0
        %v766 = vadd.f32 %v738, 1.0
        %v767 = vadd.f32 %v740, 1.0
        %v768 = vadd.f32 %v742, 1.0
        %v769 = vadd.f32 %v744, 1.0
        %v770 = vadd.f32 %v746, 1.0
        %v771 = vadd.f32 %v748, 1.0
        %v772 = vadd.f32 %v750, 1.0
        %v773 = vadd.f32 %v752, 1.0
        %v774 = vadd.f32 %v754, 1.0
        %v775 = vadd.f32 %v756, 1.0
        %v776 = vadd.f32 %v758, 1.0
        %v777 = vadd.f32 %v760, 1.0
        %v778 = vadd.f32 %v762, 1.0
        %v779 = vrcp.pop %v763
        %v780 = vmul.f32 1.0, %v779
        %v781 = vrcp.pop %v764
        %v782 = vmul.f32 1.0, %v781
        %v783 = vrcp.pop %v765
        %v784 = vmul.f32 1.0, %v783
        %v785 = vrcp.pop %v766
        %v786 = vmul.f32 1.0, %v785
        %v787 = vrcp.pop %v767
        %v788 = vmul.f32 1.0, %v787
        %v789 = vrcp.pop %v768
        %v790 = vmul.f32 1.0, %v789
        %v791 = vrcp.pop %v769
        %v792 = vmul.f32 1.0, %v791
        %v793 = vrcp.pop %v770
        %v794 = vmul.f32 1.0, %v793
        %v795 = vrcp.pop %v771
        %v796 = vmul.f32 1.0, %v795
        %v797 = vrcp.pop %v772
        %v798 = vmul.f32 1.0, %v797
        %v799 = vrcp.pop %v773
        %v800 = vmul.f32 1.0, %v799
        %v801 = vrcp.pop %v774
        %v802 = vmul.f32 1.0, %v801
        %v803 = vrcp.pop %v775
        %v804 = vmul.f32 1.0, %v803
        %v805 = vrcp.pop %v776
        %v806 = vmul.f32 1.0, %v805
        %v807 = vrcp.pop %v777
        %v808 = vmul.f32 1.0, %v807
        %v809 = vrcp.pop %v778
        %v810 = vmul.f32 1.0, %v809
        %v811 = vmul.f32 %v652, %v780
        %v812 = vmul.f32 %v655, %v782
        %v813 = vmul.f32 %v660, %v784
        %v814 = vmul.f32 %v663, %v786
        %v815 = vmul.f32 %v668, %v788
        %v816 = vmul.f32 %v671, %v790
        %v817 = vmul.f32 %v676, %v792
        %v818 = vmul.f32 %v679, %v794
        %v819 = vmul.f32 %v684, %v796
        %v820 = vmul.f32 %v687, %v798
        %v821 = vmul.f32 %v692, %v800
        %v822 = vmul.f32 %v695, %v802
        %v823 = vmul.f32 %v700, %v804
        %v824 = vmul.f32 %v703, %v806
        %v825 = vmul.f32 %v708, %v808
        %v826 = vmul.f32 %v711, %v810
        %v827 = vsel %vm714, 1, 0
        %v828 = vlaneseq
        %v829 = vshrl.u32 %v828, 7
        %v830 = vsub.s32 1, %v829
        %v831 = vrot.slane %v827, %v830
        %vm832 = vcmp.eq.s32.totalorder %v831, 1
        %v833 = vsel %vm832, %v811, 1.0
        %v834 = vsel %vm832, %v812, 1.0
        %v835 = vsel %vm832, %v813, 1.0
        %v836 = vsel %vm832, %v814, 1.0
        %v837 = vsel %vm832, %v815, 1.0
        %v838 = vsel %vm832, %v816, 1.0
        %v839 = vsel %vm832, %v817, 1.0
        %v840 = vsel %vm832, %v818, 1.0
        %v841 = vsel %vm832, %v819, 1.0
        %v842 = vsel %vm832, %v820, 1.0
        %v843 = vsel %vm832, %v821, 1.0
        %v844 = vsel %vm832, %v822, 1.0
        %v845 = vsel %vm832, %v823, 1.0
        %v846 = vsel %vm832, %v824, 1.0
        %v847 = vsel %vm832, %v825, 1.0
        %v848 = vsel %vm832, %v826, 1.0
        %v849 = vmul.f32 %v652, %v833
        %v850 = vmul.f32 %v655, %v834
        %v851 = vmul.f32 %v660, %v835
        %v852 = vmul.f32 %v663, %v836
        %v853 = vmul.f32 %v668, %v837
        %v854 = vmul.f32 %v671, %v838
        %v855 = vmul.f32 %v676, %v839
        %v856 = vmul.f32 %v679, %v840
        %v857 = vmul.f32 %v684, %v841
        %v858 = vmul.f32 %v687, %v842
        %v859 = vmul.f32 %v692, %v843
        %v860 = vmul.f32 %v695, %v844
        %v861 = vmul.f32 %v700, %v845
        %v862 = vmul.f32 %v703, %v846
        %v863 = vmul.f32 %v708, %v847
        %v864 = vmul.f32 %v711, %v848
        %865 = vst [vmem:[%s374] sm:$0xff] %v849
        %866 = vst [vmem:[%s374 + $0x8] sm:$0xff] %v850
        %867 = vst [vmem:[%s374 + $0x10] sm:$0xff] %v851
        %868 = vst [vmem:[%s374 + $0x18] sm:$0xff] %v852
        %869 = vst [vmem:[%s374 + $0x20] sm:$0xff] %v853
        %870 = vst [vmem:[%s374 + $0x28] sm:$0xff] %v854
        %871 = vst [vmem:[%s374 + $0x30] sm:$0xff] %v855
        %872 = vst [vmem:[%s374 + $0x38] sm:$0xff] %v856
        %873 = vst [vmem:[%s374 + $0x40] sm:$0xff] %v857
        %874 = vst [vmem:[%s374 + $0x48] sm:$0xff] %v858
        %875 = vst [vmem:[%s374 + $0x50] sm:$0xff] %v859
        %876 = vst [vmem:[%s374 + $0x58] sm:$0xff] %v860
        %877 = vst [vmem:[%s374 + $0x60] sm:$0xff] %v861
        %878 = vst [vmem:[%s374 + $0x68] sm:$0xff] %v862
        %879 = vst [vmem:[%s374 + $0x70] sm:$0xff] %v863
        %880 = vst [vmem:[%s374 + $0x78] sm:$0xff] %v864
        %s881 = sand.u32 %s114, 1
        %s882 = sand.u32 %s114, 1
        %s883 = smul.addr %s882, 128
        %s884 = scalar_lea.vmem [#allocation3], %s883
        // Predicated region
        $region74: #{_lambda_.1} parent=68 // pred_check
          %p885 = pneg %p124
        $region75: #{_lambda_.1} parent=68 // pred_check_branch
          %887 = sbr.rel (%p885) target = $region77
        $region76: #{_lambda_.1} parent=68 // pred_region
          %s888 = smul.u32 16, %s18
          %s889 = smul.addr %s888, 2
          %s890 = sadd.s32 %s19, %s889
          %s891 = smul.addr %s890, 8
          %s892 = scalar_lea.vmem %s3, %s891
          // Predicated region
          $region78: #{_lambda_.1} parent=76 // pred_check
            _
          $region79: #{_lambda_.1} parent=76 // pred_check_branch
            %894 = sbr.rel (0) target = $region81
          $region80: #{_lambda_.1} parent=76 // pred_region
            // Predicated region
            $region82: #{_lambda_.1} parent=80 // pred_check
              _
            $region83: #{_lambda_.1} parent=80 // pred_check_branch
              %896 = sbr.rel (0) target = $region85
            $region84: #{_lambda_.1} parent=80 // pred_region
              // Predicated region
              $region97: #{_lambda_.1} parent=84 // pred_check
                _
              $region98: #{_lambda_.1} parent=84 // pred_check_branch
                %941 = sbr.rel (0) target = $region100
              $region99: #{_lambda_.1} parent=84 // pred_region
                loop: start=0, step=1, limit=1
                $region101: #{_lambda_.1} parent=99 // loop_pre_header
                  _
                $region102: #{_lambda_.1} parent=99 // loop_header
                  %s943 = sphi 0, %s947
                  %p944 = scmp.ge.s32.totalorder %s943, 1
                  %s948 = sphi %s884, %s884
                  %s949 = sphi %s892, %s892
                $region103: #{_lambda_.1} parent=99 // loop_header_branch
                  %946 = sbr.rel (%p944) target = $region107
                $region104: #{_lambda_.1} parent=99 // loop_body
                  %v950 = vld [vmem:[%s948] sm:$0xff]
                  %951 = vst [vmem:[%s949] sm:$0xff] %v950
                  %v952 = vld [vmem:[%s948 + $0x8] sm:$0xff]
                  %953 = vst [vmem:[%s949 + $0x10] sm:$0xff] %v952
                  %v954 = vld [vmem:[%s948 + $0x10] sm:$0xff]
                  %955 = vst [vmem:[%s949 + $0x20] sm:$0xff] %v954
                  %v956 = vld [vmem:[%s948 + $0x18] sm:$0xff]
                  %957 = vst [vmem:[%s949 + $0x30] sm:$0xff] %v956
                  %v958 = vld [vmem:[%s948 + $0x20] sm:$0xff]
                  %959 = vst [vmem:[%s949 + $0x40] sm:$0xff] %v958
                  %v960 = vld [vmem:[%s948 + $0x28] sm:$0xff]
                  %961 = vst [vmem:[%s949 + $0x50] sm:$0xff] %v960
                  %v962 = vld [vmem:[%s948 + $0x30] sm:$0xff]
                  %963 = vst [vmem:[%s949 + $0x60] sm:$0xff] %v962
                  %v964 = vld [vmem:[%s948 + $0x38] sm:$0xff]
                  %965 = vst [vmem:[%s949 + $0x70] sm:$0xff] %v964
                  %v966 = vld [vmem:[%s948 + $0x40] sm:$0xff]
                  %967 = vst [vmem:[%s949 + $0x80] sm:$0xff] %v966
                  %v968 = vld [vmem:[%s948 + $0x48] sm:$0xff]
                  %969 = vst [vmem:[%s949 + $0x90] sm:$0xff] %v968
                  %v970 = vld [vmem:[%s948 + $0x50] sm:$0xff]
                  %971 = vst [vmem:[%s949 + $0xa0] sm:$0xff] %v970
                  %v972 = vld [vmem:[%s948 + $0x58] sm:$0xff]
                  %973 = vst [vmem:[%s949 + $0xb0] sm:$0xff] %v972
                  %v974 = vld [vmem:[%s948 + $0x60] sm:$0xff]
                  %975 = vst [vmem:[%s949 + $0xc0] sm:$0xff] %v974
                  %v976 = vld [vmem:[%s948 + $0x68] sm:$0xff]
                  %977 = vst [vmem:[%s949 + $0xd0] sm:$0xff] %v976
                  %v978 = vld [vmem:[%s948 + $0x70] sm:$0xff]
                  %979 = vst [vmem:[%s949 + $0xe0] sm:$0xff] %v978
                  %v980 = vld [vmem:[%s948 + $0x78] sm:$0xff]
                  %981 = vst [vmem:[%s949 + $0xf0] sm:$0xff] %v980
                $region105: #{_lambda_.1} parent=99 // loop_footer
                  %s947 = sadd.s32 1, %s943
                $region106: #{_lambda_.1} parent=99 // loop_footer_branch
                  %942 = sbr.rel target = $region102
                $region107: #{_lambda_.1} parent=99 // loop_exit
                  _
              $region100: #{_lambda_.1} parent=84 // pred_fallthru
                _
              // Predicated region
              $region108: #{_lambda_.1} parent=84 // pred_check
                _
              $region109: #{_lambda_.1} parent=84 // pred_check_branch
                %983 = sbr.rel target = $region111
              $region110: #{_lambda_.1} parent=84 // pred_region
                _
              $region111: #{_lambda_.1} parent=84 // pred_fallthru
                _
            $region85: #{_lambda_.1} parent=80 // pred_fallthru
              _
            // Predicated region
            $region86: #{_lambda_.1} parent=80 // pred_check
              _
            $region87: #{_lambda_.1} parent=80 // pred_check_branch
              %898 = sbr.rel target = $region89
            $region88: #{_lambda_.1} parent=80 // pred_region
              loop: start=0, step=1, limit=1
              $region90: #{_lambda_.1} parent=88 // loop_pre_header
                _
              $region91: #{_lambda_.1} parent=88 // loop_header
                %s901 = sphi 0, %s905
                %p902 = scmp.ge.s32.totalorder %s901, 1
                %s906 = sphi %s884, %s884
                %s907 = sphi %s892, %s892
              $region92: #{_lambda_.1} parent=88 // loop_header_branch
                %904 = sbr.rel (%p902) target = $region96
              $region93: #{_lambda_.1} parent=88 // loop_body
                %v908 = vld [vmem:[%s906] sm:$0xff]
                %909 = vst [vmem:[%s907] sm:$0xff] %v908
                %v910 = vld [vmem:[%s906 + $0x8] sm:$0xff]
                %911 = vst [vmem:[%s907 + $0x10] sm:$0xff] %v910
                %v912 = vld [vmem:[%s906 + $0x10] sm:$0xff]
                %913 = vst [vmem:[%s907 + $0x20] sm:$0xff] %v912
                %v914 = vld [vmem:[%s906 + $0x18] sm:$0xff]
                %915 = vst [vmem:[%s907 + $0x30] sm:$0xff] %v914
                %v916 = vld [vmem:[%s906 + $0x20] sm:$0xff]
                %917 = vst [vmem:[%s907 + $0x40] sm:$0xff] %v916
                %v918 = vld [vmem:[%s906 + $0x28] sm:$0xff]
                %919 = vst [vmem:[%s907 + $0x50] sm:$0xff] %v918
                %v920 = vld [vmem:[%s906 + $0x30] sm:$0xff]
                %921 = vst [vmem:[%s907 + $0x60] sm:$0xff] %v920
                %v922 = vld [vmem:[%s906 + $0x38] sm:$0xff]
                %923 = vst [vmem:[%s907 + $0x70] sm:$0xff] %v922
                %v924 = vld [vmem:[%s906 + $0x40] sm:$0xff]
                %925 = vst [vmem:[%s907 + $0x80] sm:$0xff] %v924
                %v926 = vld [vmem:[%s906 + $0x48] sm:$0xff]
                %927 = vst [vmem:[%s907 + $0x90] sm:$0xff] %v926
                %v928 = vld [vmem:[%s906 + $0x50] sm:$0xff]
                %929 = vst [vmem:[%s907 + $0xa0] sm:$0xff] %v928
                %v930 = vld [vmem:[%s906 + $0x58] sm:$0xff]
                %931 = vst [vmem:[%s907 + $0xb0] sm:$0xff] %v930
                %v932 = vld [vmem:[%s906 + $0x60] sm:$0xff]
                %933 = vst [vmem:[%s907 + $0xc0] sm:$0xff] %v932
                %v934 = vld [vmem:[%s906 + $0x68] sm:$0xff]
                %935 = vst [vmem:[%s907 + $0xd0] sm:$0xff] %v934
                %v936 = vld [vmem:[%s906 + $0x70] sm:$0xff]
                %937 = vst [vmem:[%s907 + $0xe0] sm:$0xff] %v936
                %v938 = vld [vmem:[%s906 + $0x78] sm:$0xff]
                %939 = vst [vmem:[%s907 + $0xf0] sm:$0xff] %v938
              $region94: #{_lambda_.1} parent=88 // loop_footer
                %s905 = sadd.s32 1, %s901
              $region95: #{_lambda_.1} parent=88 // loop_footer_branch
                %900 = sbr.rel target = $region91
              $region96: #{_lambda_.1} parent=88 // loop_exit
                _
            $region89: #{_lambda_.1} parent=80 // pred_fallthru
              _
          $region81: #{_lambda_.1} parent=76 // pred_fallthru
            _
          %984 = vnop
        $region77: #{_lambda_.1} parent=68 // pred_fallthru
          _
      $region69: #{_lambda_.1} parent=5 // pred_fallthru
        _
      %p985 = scmp.le.s32.totalorder 2, %s9
      // Predicated region
      $region112: #{_lambda_.1} parent=5 // pred_check
        %p986 = pneg %p985
      $region113: #{_lambda_.1} parent=5 // pred_check_branch
        %988 = sbr.rel (%p986) target = $region115
      $region114: #{_lambda_.1} parent=5 // pred_region
        %s989 = ssub.s32 %s9, 2
        // Predicated region
        $region116: #{_lambda_.1} parent=114 // pred_check
          %p990 = pneg %p130
        $region117: #{_lambda_.1} parent=114 // pred_check_branch
          %992 = sbr.rel (%p990) target = $region119
        $region118: #{_lambda_.1} parent=114 // pred_region
          %s993 = sand.u32 %s115, 1
          %s994 = sand.u32 %s115, 1
          %s995 = smul.addr %s994, 128
          %s996 = scalar_lea.vmem [#allocation3], %s995
        $region119: #{_lambda_.1} parent=114 // pred_fallthru
          _
      $region115: #{_lambda_.1} parent=5 // pred_fallthru
        _
    $region6: #{_lambda_.1} parent=1 // loop_footer
      %s13 = sadd.s32 1, %s9
    $region7: #{_lambda_.1} parent=1 // loop_footer_branch
      %8 = sbr.rel target = $region3
    $region8: #{_lambda_.1} parent=1 // loop_exit
      _

</llo_original>
